<compile_context>
chip_gen: v7x
topology: tpu7x:2x2x1
jax: 0.10.0
libtpu: 0.0.40
codegen_flags: <defaults>
</compile_context>

<pallas_src>
import math
import functools

import jax
import jax.numpy as jnp
from jax.experimental import pallas as pl
from jax.experimental.pallas import tpu as pltpu


# ----------------------------------------------------------------------------
# Constant buffer setup (matches PyTorch __init__ exactly).
# ----------------------------------------------------------------------------
def make_positional_table(d_model: int, max_len: int = 500) -> jnp.ndarray:
    """Returns pe of shape (max_len, 1, d_model), float32."""
    position = jnp.arange(0, max_len, dtype=jnp.float32)[:, None]          # (L, 1)
    div_term = jnp.exp(
        jnp.arange(0, d_model, 2, dtype=jnp.float32) * (-math.log(10000.0) / d_model)
    )                                                                       # (D/2,)
    pe = jnp.zeros((max_len, d_model), dtype=jnp.float32)
    pe = pe.at[:, 0::2].set(jnp.sin(position * div_term))
    pe = pe.at[:, 1::2].set(jnp.cos(position * div_term))
    return pe[:, None, :]                                                   # (L, 1, D)


# ----------------------------------------------------------------------------
# Pallas kernels
# ----------------------------------------------------------------------------
def _pe_add_kernel(x_ref, pe_ref, o_ref):
    # x tile: (TS, B, D) or (TS, B*D); pe tile broadcasts against it.
    o_ref[...] = x_ref[...] + pe_ref[...]


def _pe_add_dropout_kernel(x_ref, pe_ref, bits_ref, o_ref, *, threshold, scale):
    # Inverted dropout: keep with prob (1 - p), rescale kept values by 1/(1-p).
    # keep <=> uniform u32 bits >= round(p * 2**32)  (single unsigned compare).
    y = x_ref[...] + pe_ref[...]
    keep = bits_ref[...] >= jnp.uint32(threshold)
    o_ref[...] = jnp.where(keep, y * jnp.float32(scale), jnp.zeros_like(y))


# ----------------------------------------------------------------------------
# Wrapper
# ----------------------------------------------------------------------------
_TILE_TARGET_BYTES = 2 * 1024 * 1024      # per-buffer VMEM budget for one tile
_VMEM_LIMIT_BYTES = 48 * 1024 * 1024      # explicit scoped-VMEM limit (safe on v7x)


def positional_encoding(x, pe, *, dropout_p=0.1, training=False, rng_key=None,
                        seq_tile=None):
    """x: (S, B, D) float32; pe: (max_len, 1, D) float32."""
    S, B, D = x.shape
    pe_slice = pe[:S]                                     # (S, 1, D)

    # ---- layout selection (lane density) -----------------------------------
    lane_dense_3d = (D % 128 == 0)
    if lane_dense_3d:
        # Realistic transformer case: keep (S, B, D); pe streamed once per tile.
        x_in = x
        pe_in = pe_slice
        x_spec_shape = lambda ts: (ts, B, D)
        pe_spec_shape = lambda ts: (ts, 1, D)
        idx_map = lambda i: (i, 0, 0)
        out_shape2 = (S, B, D)
    else:
        # Narrow d_model: collapse (B, D) into a single wider lane axis so
        # vector stores are denser; pe is pre-broadcast in the wrapper.
        x_in = x.reshape(S, B * D)
        pe_in = jnp.broadcast_to(pe_slice, (S, B, D)).reshape(S, B * D)
        x_spec_shape = lambda ts: (ts, B * D)
        pe_spec_shape = lambda ts: (ts, B * D)
        idx_map = lambda i: (i, 0)
        out_shape2 = (S, B * D)

    # ---- sequence tile size --------------------------------------------------
    row_bytes = B * D * x.dtype.itemsize
    if seq_tile is not None:
        ts = int(seq_tile)
    else:
        ts = max(1, _TILE_TARGET_BYTES // row_bytes)
    if ts >= S:
        ts = S                                  # single full block
    elif not lane_dense_3d:
        # In the 2-D layout the tile's first axis is the sublane axis of the
        # block -> keep it a multiple of 8 (or the full dim).
        ts = max(8, (ts // 8) * 8)
        ts = min(ts, S)
    grid = (pl.cdiv(S, ts),)

    x_spec = pl.BlockSpec(x_spec_shape(ts), idx_map)
    pe_spec = pl.BlockSpec(pe_spec_shape(ts), idx_map)
    out_spec = pl.BlockSpec(x_spec_shape(ts), idx_map)
    out_shape = jax.ShapeDtypeStruct(out_shape2, x.dtype)

    compiler_params = pltpu.CompilerParams(
        dimension_semantics=("parallel",),          # shard seq tiles over TCs
        vmem_limit_bytes=_VMEM_LIMIT_BYTES,
    )

    if (not training) or dropout_p == 0.0:
        out = pl.pallas_call(
            _pe_add_kernel,
            out_shape=out_shape,
            grid=grid,
            in_specs=[x_spec, pe_spec],
            out_specs=out_spec,
            compiler_params=compiler_params,
        )(x_in, pe_in)
    else:
        if rng_key is None:
            rng_key = jax.random.PRNGKey(0)
        # Per-element uniform u32 bits; each grid tile gets its own slice so
        # the dropout mask never repeats across tiles.
        bits = jax.random.bits(rng_key, x_in.shape, dtype=jnp.uint32)
        threshold = min((1 << 32) - 1, int(round(dropout_p * float(1 << 32))))
        scale = 1.0 / (1.0 - dropout_p)
        kernel = functools.partial(
            _pe_add_dropout_kernel, threshold=threshold, scale=scale)
        out = pl.pallas_call(
            kernel,
            out_shape=out_shape,
            grid=grid,
            in_specs=[x_spec, pe_spec, x_spec],     # bits tiled like x
            out_specs=out_spec,
            compiler_params=compiler_params,
        )(x_in, pe_in, bits)

    if not lane_dense_3d:
        out = out.reshape(S, B, D)
    return out


# ----------------------------------------------------------------------------
# Demo / self-check
# ----------------------------------------------------------------------------
if __name__ == "__main__":
    MAX_LEN = 500
    DROPOUT_P = 0.1

    key = jax.random.PRNGKey(0)
    kx, kd, kx2 = jax.random.split(key, 3)

    # ---- small shape consistent with the module (collapsed lane path) ------
    S, B, D = 8, 2, 32
    x = jax.random.normal(kx, (S, B, D), dtype=jnp.float32)
    pe = make_positional_table(D, MAX_LEN)
    ref = x + pe[:S]

    out_eval = jax.block_until_ready(
        positional_encoding(x, pe, dropout_p=DROPOUT_P, training=False))
    assert out_eval.shape == (S, B, D)
    assert jnp.allclose(out_eval, ref, atol=1e-6, rtol=1e-6), "eval-mode mismatch"

    out_train = jax.block_until_ready(
        positional_encoding(x, pe, dropout_p=DROPOUT_P, training=True, rng_key=kd))
    assert out_train.shape == (S, B, D)
    nonzero = out_train != 0
    # kept entries must equal (x + pe) / (1 - p)
    assert jnp.allclose(
        jnp.where(nonzero, out_train, 0.0),
        jnp.where(nonzero, ref / (1.0 - DROPOUT_P), 0.0),
        atol=1e-5, rtol=1e-5,
    ), "training-mode dropout scaling mismatch"

    # ---- 3-D lane-dense path with multiple grid tiles (D % 128 == 0) --------
    S2, B2, D2 = 64, 4, 128
    x2 = jax.random.normal(kx2, (S2, B2, D2), dtype=jnp.float32)
    pe2 = make_positional_table(D2, MAX_LEN)
    ref2 = x2 + pe2[:S2]
    out2 = jax.block_until_ready(
        positional_encoding(x2, pe2, dropout_p=DROPOUT_P, training=False,
                            seq_tile=16))          # force grid of 4 tiles
    assert out2.shape == (S2, B2, D2)
    assert jnp.allclose(out2, ref2, atol=1e-6, rtol=1e-6), "tiled 3-D path mismatch"

    print("KERNEL_OK")
</pallas_src>

<mosaic_0001>
module attributes {stable_mosaic.version = 11 : i64} {
  func.func @_pe_add_kernel(%arg0: i32, %arg1: memref<8x64xf32, #tpu.memory_space<vmem>>, %arg2: memref<8x64xf32, #tpu.memory_space<vmem>>, %arg3: memref<8x64xf32, #tpu.memory_space<vmem>>) attributes {dimension_semantics = [#tpu.dimension_semantics<parallel>], iteration_bounds = array<i64: 1>, scalar_prefetch = 0 : i64, scratch_operands = 0 : i64, tpu.core_type = #tpu.core_type<tc>, window_params = [{transform_indices = @transform_0, window_bounds = array<i64: 8, 64>}, {transform_indices = @transform_1, window_bounds = array<i64: 8, 64>}, {transform_indices = @transform_2, window_bounds = array<i64: 8, 64>}]} {
    %c0 = arith.constant 0 : index
    %c0_0 = arith.constant 0 : index
    %0 = vector.load %arg1[%c0, %c0_0] : memref<8x64xf32, #tpu.memory_space<vmem>>, vector<8x64xf32>
    %c0_1 = arith.constant 0 : index
    %c0_2 = arith.constant 0 : index
    %1 = vector.load %arg2[%c0_1, %c0_2] : memref<8x64xf32, #tpu.memory_space<vmem>>, vector<8x64xf32>
    %2 = arith.addf %0, %1 : vector<8x64xf32>
    %c0_3 = arith.constant 0 : index
    %c0_4 = arith.constant 0 : index
    %3 = vector.load %arg3[%c0_3, %c0_4] : memref<8x64xf32, #tpu.memory_space<vmem>>, vector<8x64xf32>
    tpu.vector_store %arg3[%c0_3, %c0_4], %2 {strides = array<i32>} : memref<8x64xf32, #tpu.memory_space<vmem>>, vector<8x64xf32>,
    return
  }
  func.func @transform_0(%arg0: i32) -> (i32, i32) {
    %c0_i32 = arith.constant 0 : i32
    %c0_i32_0 = arith.constant 0 : i32
    return %arg0, %c0_i32 : i32, i32
  }
  func.func @transform_1(%arg0: i32) -> (i32, i32) {
    %c0_i32 = arith.constant 0 : i32
    %c0_i32_0 = arith.constant 0 : i32
    return %arg0, %c0_i32 : i32, i32
  }
  func.func @transform_2(%arg0: i32) -> (i32, i32) {
    %c0_i32 = arith.constant 0 : i32
    %c0_i32_0 = arith.constant 0 : i32
    return %arg0, %c0_i32 : i32, i32
  }
}

</mosaic_0001>

<llo_original>
// kernel: tpu_custom_call.1
$region0: #{tpu_custom_call.1}
  #allocation0 [shape = 'u32[]', space=smem, size = 0x4, offset = 0x4, fixed_abs, tag = 'smem constant byte address 0x4 - core index']
  #allocation1 [shape = 'u32[144,128]{1,0:T(1,128)}', space=vmem, size = 0x12000, scoped, tag = 'internal scratch']
  %s0 = inlined_call_operand.hbm [shape: f32[8,64], index: 0, kind: input, shape index: {}]
  %s1 = inlined_call_operand.hbm [shape: f32[8,64], index: 1, kind: input, shape index: {}]
  %s2 = inlined_call_operand.hbm [shape: f32[8,64], index: 2, kind: output, shape index: {}]
  %s3 = sld [smem:[#allocation0]]
  $region26: #{tpu_custom_call.1} parent=0
    _
  %s5 = ssub.s32 1, %s3
  %s6 = scalar_select 0, %s5, %s3
  $region1: #{tpu_custom_call.1} parent=0
    #allocation2 [shape = 'u8[4096]{0}', space=vmem, size = 0x1000, scoped, tag = 'input window, operand 0, single buffered']
    #allocation3 [shape = 's32[1]{0}', space=sflag, size = 0x4, scoped, tag = 'scoped memory for tpu_custom_call.1']
    #allocation4 [shape = 's32[1]{0}', space=sflag, size = 0x4, scoped, tag = 'scoped memory for tpu_custom_call.1']
    #allocation5 [shape = 'u8[4096]{0}', space=vmem, size = 0x1000, scoped, tag = 'input window, operand 1, single buffered']
    #allocation6 [shape = 's32[1]{0}', space=sflag, size = 0x4, scoped, tag = 'scoped memory for tpu_custom_call.1']
    #allocation7 [shape = 'u8[4096]{0}', space=vmem, size = 0x1000, scoped, tag = 'output window, operand 0, single buffered']
    %7 = vsyncpa [#allocation3], 0
    %8 = vsyncpa [#allocation6], 0
    %9 = vsyncpa [#allocation4], 0
    // Predicated region
    $region2: #{tpu_custom_call.1} parent=1 // pred_check
      _
    $region3: #{tpu_custom_call.1} parent=1 // pred_check_branch
      %11 = sbr.rel (0) target = $region5
    $region4: #{tpu_custom_call.1} parent=1 // pred_region
      %s13 = ssub.s32 128, 128
      %14 = vsyncadd [#allocation3], %s13
      %s16 = sshll.u32 [#allocation2], 4
      %s17 = int_to_ptr.vmem [resolvable:$true] %s16
      %19 = dma.hbm_to_vmem [thread:$0]  %s0, 128, %s17, [#allocation3]
    $region5: #{tpu_custom_call.1} parent=1 // pred_fallthru
      _
    // Predicated region
    $region6: #{tpu_custom_call.1} parent=1 // pred_check
      _
    $region7: #{tpu_custom_call.1} parent=1 // pred_check_branch
      %21 = sbr.rel (0) target = $region9
    $region8: #{tpu_custom_call.1} parent=1 // pred_region
      %s23 = ssub.s32 128, 128
      %24 = vsyncadd [#allocation6], %s23
      %s26 = sshll.u32 [#allocation5], 4
      %s27 = int_to_ptr.vmem [resolvable:$true] %s26
      %29 = dma.hbm_to_vmem [thread:$0]  %s1, 128, %s27, [#allocation6]
    $region9: #{tpu_custom_call.1} parent=1 // pred_fallthru
      _
    // Predicated region
    $region10: #{tpu_custom_call.1} parent=1 // pred_check
      _
    $region11: #{tpu_custom_call.1} parent=1 // pred_check_branch
      %31 = sbr.rel (0) target = $region13
    $region12: #{tpu_custom_call.1} parent=1 // pred_region
      %32 = dma.done [#allocation3], 128
    $region13: #{tpu_custom_call.1} parent=1 // pred_fallthru
      _
    // Predicated region
    $region14: #{tpu_custom_call.1} parent=1 // pred_check
      _
    $region15: #{tpu_custom_call.1} parent=1 // pred_check_branch
      %34 = sbr.rel (0) target = $region17
    $region16: #{tpu_custom_call.1} parent=1 // pred_region
      %35 = dma.done [#allocation6], 128
    $region17: #{tpu_custom_call.1} parent=1 // pred_fallthru
      _
    %v36 = vld [vmem:[#allocation2] sm:$0xff]
    %v37 = vld [vmem:[#allocation5] sm:$0xff]
    %v38 = vadd.f32 %v36, %v37
    %vm39 = vcmask 523264
    %40 = vst.msk [vmem:[#allocation7] sm:$0xff] %vm39, %v38
    // Predicated region
    $region18: #{tpu_custom_call.1} parent=1 // pred_check
      _
    $region19: #{tpu_custom_call.1} parent=1 // pred_check_branch
      %42 = sbr.rel (0) target = $region21
    $region20: #{tpu_custom_call.1} parent=1 // pred_region
      %s44 = ssub.s32 128, 128
      %45 = vsyncadd [#allocation4], %s44
      %s47 = sshll.u32 [#allocation7], 4
      %s48 = int_to_ptr.vmem [resolvable:$true] %s47
      %50 = dma.vmem_to_hbm [thread:$0]  %s48, 128, %s2, [#allocation4]
    $region21: #{tpu_custom_call.1} parent=1 // pred_fallthru
      _
    // Predicated region
    $region22: #{tpu_custom_call.1} parent=1 // pred_check
      _
    $region23: #{tpu_custom_call.1} parent=1 // pred_check_branch
      %52 = sbr.rel (0) target = $region25
    $region24: #{tpu_custom_call.1} parent=1 // pred_region
      %53 = dma.done [#allocation4], 128
    $region25: #{tpu_custom_call.1} parent=1 // pred_fallthru
      _
    %54 = vsyncpa [#allocation3], 1
    %55 = vsyncpa [#allocation6], 1
    %56 = vsyncpa [#allocation4], 1

</llo_original>
